<compile_context>
chip_gen: v5e
topology: v5e:2x2
jax: 0.10.0
libtpu: 0.0.40
codegen_flags: <defaults>
</compile_context>

<pallas_src>
import functools

import jax
import jax.numpy as jnp
from jax.experimental import pallas as pl
from jax.experimental.pallas import tpu as pltpu


def mha_kernel(xq_ref, xkv_ref, wq_ref, bq_ref, wkv_ref, bkv_ref,
               wo_ref, bo_ref, o_ref, ego_ref, *, num_heads):
    Bb, N, Dq = xq_ref.shape
    _, L, Dkv = xkv_ref.shape
    Cqk = wq_ref.shape[1]
    Cv = wo_ref.shape[0]
    F = wo_ref.shape[1]
    c = Cqk // num_heads
    cv = Cv // num_heads
    dp_scale = float(c) ** -0.5

    # --- fused projections over the whole batch block --------------------------
    xq = xq_ref[...].reshape(Bb * N, Dq)
    xkv = xkv_ref[...].reshape(Bb * L, Dkv)

    q = jnp.dot(xq, wq_ref[...], preferred_element_type=jnp.float32) + bq_ref[...]
    kv = jnp.dot(xkv, wkv_ref[...], preferred_element_type=jnp.float32) + bkv_ref[...]
    q = q * dp_scale                                   # scale after bias, as in torch

    q3 = q.reshape(Bb, N, Cqk)
    kv3 = kv.reshape(Bb, L, Cqk + Cv)

    # --- attention: static unrolled head loop, batched over Bb via einsum ------
    # (no kh.T, no head concatenation; head outputs are folded straight into the
    #  output projection accumulator)
    acc = jnp.zeros((Bb * N, F), jnp.float32)
    for h in range(num_heads):
        qh = kv_slice = None  # readability only
        qh = q3[:, :, h * c:(h + 1) * c]                     # (Bb, N, c)
        kh = kv3[:, :, h * c:(h + 1) * c]                    # (Bb, L, c)
        vh = kv3[:, :, Cqk + h * cv:Cqk + (h + 1) * cv]      # (Bb, L, cv)

        s = jnp.einsum('bnc,blc->bnl', qh, kh,
                       preferred_element_type=jnp.float32)   # (Bb, N, L)
        s = s - jnp.max(s, axis=-1, keepdims=True)
        p = jnp.exp(s)
        denom = jnp.sum(p, axis=-1, keepdims=True)
        # EUP approx reciprocal + one Newton refinement (no VALU divide, ~f32 exact)
        r = pl.reciprocal(denom, approx=True)
        r = r * (2.0 - denom * r)
        p = p * r

        # ego attention = attention of query row 0, for this head
        ego_ref[:, h:h + 1, :] = p[:, 0:1, :].astype(ego_ref.dtype)

        oh = jnp.einsum('bnl,blc->bnc', p, vh,
                        preferred_element_type=jnp.float32)  # (Bb, N, cv)
        acc = acc + jnp.dot(oh.reshape(Bb * N, cv),
                            wo_ref[h * cv:(h + 1) * cv, :],
                            preferred_element_type=jnp.float32)

    out = acc + bo_ref[...]
    o_ref[...] = out.reshape(Bb, N, F).astype(o_ref.dtype)


def multi_head_attention(x_q, x_kv, params, num_heads):
    """Pallas-backed MultiHeadAttention forward (default flags)."""
    wq, bq, wk, bk, wv, bv, wo, bo = params
    B, N, Dq = x_q.shape
    _, L, Dkv = x_kv.shape
    Cqk = wq.shape[1]
    Cv = wv.shape[1]
    F = wo.shape[1]

    # K and V share the same input -> fuse their projections into one matmul.
    wkv = jnp.concatenate([wk, wv], axis=1)          # (Dkv, Cqk + Cv)
    bkv = jnp.concatenate([bk, bv], axis=1)          # (1, Cqk + Cv)

    # Batch blocking: at most 2 grid steps (both v7x TensorCores busy), with the
    # rest of the batch fused into each step's projection matmuls.
    G = 2 if (B >= 2 and B % 2 == 0) else 1
    Bb = B // G

    kernel = functools.partial(mha_kernel, num_heads=num_heads)

    def full_spec(shape):
        return pl.BlockSpec(shape, lambda b: (0,) * len(shape))

    grid_spec = pltpu.PrefetchScalarGridSpec(
        num_scalar_prefetch=0,
        grid=(G,),
        in_specs=[
            pl.BlockSpec((Bb, N, Dq), lambda b: (b, 0, 0)),
            pl.BlockSpec((Bb, L, Dkv), lambda b: (b, 0, 0)),
            full_spec((Dq, Cqk)), full_spec((1, Cqk)),
            full_spec((Dkv, Cqk + Cv)), full_spec((1, Cqk + Cv)),
            full_spec((Cv, F)), full_spec((1, F)),
        ],
        out_specs=[
            pl.BlockSpec((Bb, N, F), lambda b: (b, 0, 0)),
            pl.BlockSpec((Bb, num_heads, L), lambda b: (b, 0, 0)),
        ],
    )

    out, ego = pl.pallas_call(
        kernel,
        out_shape=(
            jax.ShapeDtypeStruct((B, N, F), x_q.dtype),
            jax.ShapeDtypeStruct((B, num_heads, L), jnp.float32),
        ),
        grid_spec=grid_spec,
        compiler_params=pltpu.CompilerParams(dimension_semantics=("parallel",)),
    )(x_q, x_kv, wq, bq, wkv, bkv, wo, bo)
    # TODO(synk): for large L / channel counts add a KV-tile grid axis with
    # flash-style online softmax (m/l/acc scratch) and an explicit
    # vmem_limit_bytes sized for v7x's 64 MiB VMEM.
    return out, ego


def reference(x_q, x_kv, params, num_heads):
    """Pure-JAX reference matching the PyTorch forward."""
    wq, bq, wk, bk, wv, bv, wo, bo = params
    q = x_q @ wq + bq
    k = x_kv @ wk + bk
    v = x_kv @ wv + bv
    B, N, Cqk = q.shape
    L = k.shape[1]
    Cv = v.shape[2]
    c = Cqk // num_heads
    cv = Cv // num_heads
    q = q.reshape(B, N, num_heads, c).transpose(0, 2, 1, 3) * (c ** -0.5)
    k = k.reshape(B, L, num_heads, c).transpose(0, 2, 1, 3)
    v = v.reshape(B, L, num_heads, cv).transpose(0, 2, 1, 3)
    attn = jnp.einsum('bhic,bhjc->bhij', q, k)
    attn = jax.nn.softmax(attn, axis=-1)
    ego = attn[:, :, 0, :]
    o = jnp.einsum('bhij,bhjc->bhic', attn, v)
    o = o.transpose(0, 2, 1, 3).reshape(B, N, Cv)
    return o @ wo + bo, ego


if __name__ == "__main__":
    # Module config (small, consistent with the forward semantics):
    num_heads = 4
    num_q_input_channels = 32    # D
    num_kv_input_channels = 32   # C
    num_qk_channels = 32
    num_v_channels = 32
    num_output_channels = 32

    B, N, L = 2, 8, 8

    key = jax.random.PRNGKey(0)
    keys = jax.random.split(key, 10)

    x_q = jax.random.normal(keys[0], (B, N, num_q_input_channels), dtype=jnp.float32)
    x_kv = jax.random.normal(keys[1], (B, L, num_kv_input_channels), dtype=jnp.float32)

    def init_linear(kw, kb, fan_in, fan_out):
        # deterministic synthetic init (shapes match nn.Linear(fan_in, fan_out))
        w = jax.random.normal(kw, (fan_in, fan_out), dtype=jnp.float32) * 0.1
        b = jax.random.normal(kb, (1, fan_out), dtype=jnp.float32) * 0.1
        return w, b

    wq, bq = init_linear(keys[2], keys[3], num_q_input_channels, num_qk_channels)
    wk, bk = init_linear(keys[4], keys[5], num_kv_input_channels, num_qk_channels)
    wv, bv = init_linear(keys[6], keys[7], num_kv_input_channels, num_v_channels)
    wo, bo = init_linear(keys[8], keys[9], num_v_channels, num_output_channels)
    params = (wq, bq, wk, bk, wv, bv, wo, bo)

    out, ego = multi_head_attention(x_q, x_kv, params, num_heads)
    out = jax.block_until_ready(out)
    ego = jax.block_until_ready(ego)

    out_ref, ego_ref = reference(x_q, x_kv, params, num_heads)

    assert out.shape == (B, N, num_output_channels)
    assert ego.shape == (B, num_heads, L)
    assert jnp.allclose(out, out_ref, atol=1e-5, rtol=1e-5)
    assert jnp.allclose(ego, ego_ref, atol=1e-5, rtol=1e-5)

    # TODO(synk): pad_mask / causal mask / rotary embeddings / kv_cache / dropout
    # branches of the PyTorch forward are not exercised in the default path and
    # are not implemented in this kernel.
    print("KERNEL_OK")
</pallas_src>

<mosaic_0001>
module attributes {stable_mosaic.version = 11 : i64} {
  func.func @mha_kernel(%arg0: i32, %arg1: memref<1x8x32xf32, #tpu.memory_space<vmem>>, %arg2: memref<1x8x32xf32, #tpu.memory_space<vmem>>, %arg3: memref<32x32xf32, #tpu.memory_space<vmem>>, %arg4: memref<1x32xf32, #tpu.memory_space<vmem>>, %arg5: memref<32x64xf32, #tpu.memory_space<vmem>>, %arg6: memref<1x64xf32, #tpu.memory_space<vmem>>, %arg7: memref<32x32xf32, #tpu.memory_space<vmem>>, %arg8: memref<1x32xf32, #tpu.memory_space<vmem>>, %arg9: memref<1x8x32xf32, #tpu.memory_space<vmem>>, %arg10: memref<1x4x8xf32, #tpu.memory_space<vmem>>) attributes {dimension_semantics = [#tpu.dimension_semantics<parallel>], iteration_bounds = array<i64: 2>, scalar_prefetch = 0 : i64, scratch_operands = 0 : i64, tpu.core_type = #tpu.core_type<tc>, window_params = [{transform_indices = @transform_0, window_bounds = array<i64: 1, 8, 32>}, {transform_indices = @transform_1, window_bounds = array<i64: 1, 8, 32>}, {pipeline_mode = #tpu.pipeline_mode<synchronous>, transform_indices = @transform_2, window_bounds = array<i64: 32, 32>}, {pipeline_mode = #tpu.pipeline_mode<synchronous>, transform_indices = @transform_3, window_bounds = array<i64: 1, 32>}, {pipeline_mode = #tpu.pipeline_mode<synchronous>, transform_indices = @transform_4, window_bounds = array<i64: 32, 64>}, {pipeline_mode = #tpu.pipeline_mode<synchronous>, transform_indices = @transform_5, window_bounds = array<i64: 1, 64>}, {pipeline_mode = #tpu.pipeline_mode<synchronous>, transform_indices = @transform_6, window_bounds = array<i64: 32, 32>}, {pipeline_mode = #tpu.pipeline_mode<synchronous>, transform_indices = @transform_7, window_bounds = array<i64: 1, 32>}, {transform_indices = @transform_8, window_bounds = array<i64: 1, 8, 32>}, {transform_indices = @transform_9, window_bounds = array<i64: 1, 4, 8>}]} {
    %c0 = arith.constant 0 : index
    %c0_0 = arith.constant 0 : index
    %c0_1 = arith.constant 0 : index
    %0 = vector.load %arg1[%c0, %c0_0, %c0_1] : memref<1x8x32xf32, #tpu.memory_space<vmem>>, vector<1x8x32xf32>
    %1 = vector.shape_cast %0 : vector<1x8x32xf32> to vector<8x32xf32>
    %c0_2 = arith.constant 0 : index
    %c0_3 = arith.constant 0 : index
    %c0_4 = arith.constant 0 : index
    %2 = vector.load %arg2[%c0_2, %c0_3, %c0_4] : memref<1x8x32xf32, #tpu.memory_space<vmem>>, vector<1x8x32xf32>
    %3 = vector.shape_cast %2 : vector<1x8x32xf32> to vector<8x32xf32>
    %c0_5 = arith.constant 0 : index
    %c0_6 = arith.constant 0 : index
    %4 = vector.load %arg3[%c0_5, %c0_6] : memref<32x32xf32, #tpu.memory_space<vmem>>, vector<32x32xf32>
    %cst = arith.constant dense<0.000000e+00> : vector<8x32xf32>
    %5 = tpu.matmul %1, %4, %cst {dimension_numbers = #tpu.dot_dimension_numbers<[1], [0], [0], [1], [0, 0, 1, 1], [], []>} : vector<8x32xf32>, vector<32x32xf32>, vector<8x32xf32> -> vector<8x32xf32>
    %c0_7 = arith.constant 0 : index
    %c0_8 = arith.constant 0 : index
    %6 = vector.load %arg4[%c0_7, %c0_8] : memref<1x32xf32, #tpu.memory_space<vmem>>, vector<1x32xf32>
    %7 = vector.broadcast %6 : vector<1x32xf32> to vector<8x32xf32>
    %8 = arith.addf %5, %7 : vector<8x32xf32>
    %c0_9 = arith.constant 0 : index
    %c0_10 = arith.constant 0 : index
    %9 = vector.load %arg5[%c0_9, %c0_10] : memref<32x64xf32, #tpu.memory_space<vmem>>, vector<32x64xf32>
    %cst_11 = arith.constant dense<0.000000e+00> : vector<8x64xf32>
    %10 = tpu.matmul %3, %9, %cst_11 {dimension_numbers = #tpu.dot_dimension_numbers<[1], [0], [0], [1], [0, 0, 1, 1], [], []>} : vector<8x32xf32>, vector<32x64xf32>, vector<8x64xf32> -> vector<8x64xf32>
    %c0_12 = arith.constant 0 : index
    %c0_13 = arith.constant 0 : index
    %11 = vector.load %arg6[%c0_12, %c0_13] : memref<1x64xf32, #tpu.memory_space<vmem>>, vector<1x64xf32>
    %12 = vector.broadcast %11 : vector<1x64xf32> to vector<8x64xf32>
    %13 = arith.addf %10, %12 : vector<8x64xf32>
    %cst_14 = arith.constant 0.353553385 : f32
    %14 = vector.broadcast %cst_14 : f32 to vector<8x32xf32>
    %15 = arith.mulf %8, %14 : vector<8x32xf32>
    %16 = vector.shape_cast %15 : vector<8x32xf32> to vector<1x8x32xf32>
    %17 = vector.shape_cast %13 : vector<8x64xf32> to vector<1x8x64xf32>
    %cst_15 = arith.constant 0.000000e+00 : f32
    %18 = vector.broadcast %cst_15 : f32 to vector<8x32xf32>
    %19 = vector.extract_strided_slice %16 {offsets = [0, 0, 0], sizes = [1, 8, 8], strides = [1, 1, 1]} : vector<1x8x32xf32> to vector<1x8x8xf32>
    %20 = vector.extract_strided_slice %17 {offsets = [0, 0, 0], sizes = [1, 8, 8], strides = [1, 1, 1]} : vector<1x8x64xf32> to vector<1x8x8xf32>
    %21 = vector.extract_strided_slice %17 {offsets = [0, 0, 32], sizes = [1, 8, 8], strides = [1, 1, 1]} : vector<1x8x64xf32> to vector<1x8x8xf32>
    "tpu.trace_start"() <{level = 10 : i32, message = "bnc,blc->bnl"}> : () -> ()
    %cst_16 = arith.constant dense<0.000000e+00> : vector<1x8x8xf32>
    %22 = tpu.matmul %19, %20, %cst_16 {dimension_numbers = #tpu.dot_dimension_numbers<[2], [2], [1], [1], [0, 0, 0, 1, 1, 1], [0], [0]>} : vector<1x8x8xf32>, vector<1x8x8xf32>, vector<1x8x8xf32> -> vector<1x8x8xf32>
    "tpu.trace_stop"() : () -> ()
    %cst_17 = arith.constant dense<0xFF800000> : vector<1x8xf32>
    %23 = vector.multi_reduction <maximumf>, %22, %cst_17 [2] : vector<1x8x8xf32> to vector<1x8xf32>
    %24 = vector.shape_cast %23 : vector<1x8xf32> to vector<1x8x1xf32>
    %25 = vector.broadcast %24 : vector<1x8x1xf32> to vector<1x8x8xf32>
    %26 = arith.subf %22, %25 : vector<1x8x8xf32>
    %27 = math.exp %26 : vector<1x8x8xf32>
    %cst_18 = arith.constant dense<0.000000e+00> : vector<1x8xf32>
    %28 = vector.multi_reduction <add>, %27, %cst_18 [2] : vector<1x8x8xf32> to vector<1x8xf32>
    %29 = vector.shape_cast %28 : vector<1x8xf32> to vector<1x8x1xf32>
    %30 = tpu.reciprocal %29 {approx = true} : vector<1x8x1xf32> -> vector<1x8x1xf32>
    %31 = arith.mulf %29, %30 : vector<1x8x1xf32>
    %cst_19 = arith.constant 2.000000e+00 : f32
    %32 = vector.broadcast %cst_19 : f32 to vector<1x8x1xf32>
    %33 = arith.subf %32, %31 : vector<1x8x1xf32>
    %34 = arith.mulf %30, %33 : vector<1x8x1xf32>
    %35 = vector.broadcast %34 : vector<1x8x1xf32> to vector<1x8x8xf32>
    %36 = arith.mulf %27, %35 : vector<1x8x8xf32>
    %37 = vector.extract_strided_slice %36 {offsets = [0, 0, 0], sizes = [1, 1, 8], strides = [1, 1, 1]} : vector<1x8x8xf32> to vector<1x1x8xf32>
    %c0_20 = arith.constant 0 : index
    %c0_21 = arith.constant 0 : index
    %c0_22 = arith.constant 0 : index
    %38 = vector.load %arg10[%c0_20, %c0_21, %c0_22] : memref<1x4x8xf32, #tpu.memory_space<vmem>>, vector<1x1x8xf32>
    tpu.vector_store %arg10[%c0_20, %c0_21, %c0_22], %37 {strides = array<i32>} : memref<1x4x8xf32, #tpu.memory_space<vmem>>, vector<1x1x8xf32>,
    "tpu.trace_start"() <{level = 10 : i32, message = "bnl,blc->bnc"}> : () -> ()
    %cst_23 = arith.constant dense<0.000000e+00> : vector<1x8x8xf32>
    %39 = tpu.matmul %36, %21, %cst_23 {dimension_numbers = #tpu.dot_dimension_numbers<[2], [1], [1], [2], [0, 0, 0, 1, 1, 2], [0], [0]>} : vector<1x8x8xf32>, vector<1x8x8xf32>, vector<1x8x8xf32> -> vector<1x8x8xf32>
    "tpu.trace_stop"() : () -> ()
    %40 = vector.shape_cast %39 : vector<1x8x8xf32> to vector<8x8xf32>
    %c0_24 = arith.constant 0 : index
    %c0_25 = arith.constant 0 : index
    %41 = vector.load %arg7[%c0_24, %c0_25] : memref<32x32xf32, #tpu.memory_space<vmem>>, vector<8x32xf32>
    %cst_26 = arith.constant dense<0.000000e+00> : vector<8x32xf32>
    %42 = tpu.matmul %40, %41, %cst_26 {dimension_numbers = #tpu.dot_dimension_numbers<[1], [0], [0], [1], [0, 0, 1, 1], [], []>} : vector<8x8xf32>, vector<8x32xf32>, vector<8x32xf32> -> vector<8x32xf32>
    %43 = arith.addf %18, %42 : vector<8x32xf32>
    %44 = vector.extract_strided_slice %16 {offsets = [0, 0, 8], sizes = [1, 8, 8], strides = [1, 1, 1]} : vector<1x8x32xf32> to vector<1x8x8xf32>
    %45 = vector.extract_strided_slice %17 {offsets = [0, 0, 8], sizes = [1, 8, 8], strides = [1, 1, 1]} : vector<1x8x64xf32> to vector<1x8x8xf32>
    %46 = vector.extract_strided_slice %17 {offsets = [0, 0, 40], sizes = [1, 8, 8], strides = [1, 1, 1]} : vector<1x8x64xf32> to vector<1x8x8xf32>
    "tpu.trace_start"() <{level = 10 : i32, message = "bnc,blc->bnl"}> : () -> ()
    %cst_27 = arith.constant dense<0.000000e+00> : vector<1x8x8xf32>
    %47 = tpu.matmul %44, %45, %cst_27 {dimension_numbers = #tpu.dot_dimension_numbers<[2], [2], [1], [1], [0, 0, 0, 1, 1, 1], [0], [0]>} : vector<1x8x8xf32>, vector<1x8x8xf32>, vector<1x8x8xf32> -> vector<1x8x8xf32>
    "tpu.trace_stop"() : () -> ()
    %cst_28 = arith.constant dense<0xFF800000> : vector<1x8xf32>
    %48 = vector.multi_reduction <maximumf>, %47, %cst_28 [2] : vector<1x8x8xf32> to vector<1x8xf32>
    %49 = vector.shape_cast %48 : vector<1x8xf32> to vector<1x8x1xf32>
    %50 = vector.broadcast %49 : vector<1x8x1xf32> to vector<1x8x8xf32>
    %51 = arith.subf %47, %50 : vector<1x8x8xf32>
    %52 = math.exp %51 : vector<1x8x8xf32>
    %cst_29 = arith.constant dense<0.000000e+00> : vector<1x8xf32>
    %53 = vector.multi_reduction <add>, %52, %cst_29 [2] : vector<1x8x8xf32> to vector<1x8xf32>
    %54 = vector.shape_cast %53 : vector<1x8xf32> to vector<1x8x1xf32>
    %55 = tpu.reciprocal %54 {approx = true} : vector<1x8x1xf32> -> vector<1x8x1xf32>
    %56 = arith.mulf %54, %55 : vector<1x8x1xf32>
    %cst_30 = arith.constant 2.000000e+00 : f32
    %57 = vector.broadcast %cst_30 : f32 to vector<1x8x1xf32>
    %58 = arith.subf %57, %56 : vector<1x8x1xf32>
    %59 = arith.mulf %55, %58 : vector<1x8x1xf32>
    %60 = vector.broadcast %59 : vector<1x8x1xf32> to vector<1x8x8xf32>
    %61 = arith.mulf %52, %60 : vector<1x8x8xf32>
    %62 = vector.extract_strided_slice %61 {offsets = [0, 0, 0], sizes = [1, 1, 8], strides = [1, 1, 1]} : vector<1x8x8xf32> to vector<1x1x8xf32>
    %c0_31 = arith.constant 0 : index
    %c1 = arith.constant 1 : index
    %c0_32 = arith.constant 0 : index
    %63 = vector.load %arg10[%c0_31, %c1, %c0_32] : memref<1x4x8xf32, #tpu.memory_space<vmem>>, vector<1x1x8xf32>
    tpu.vector_store %arg10[%c0_31, %c1, %c0_32], %62 {strides = array<i32>} : memref<1x4x8xf32, #tpu.memory_space<vmem>>, vector<1x1x8xf32>,
    "tpu.trace_start"() <{level = 10 : i32, message = "bnl,blc->bnc"}> : () -> ()
    %cst_33 = arith.constant dense<0.000000e+00> : vector<1x8x8xf32>
    %64 = tpu.matmul %61, %46, %cst_33 {dimension_numbers = #tpu.dot_dimension_numbers<[2], [1], [1], [2], [0, 0, 0, 1, 1, 2], [0], [0]>} : vector<1x8x8xf32>, vector<1x8x8xf32>, vector<1x8x8xf32> -> vector<1x8x8xf32>
    "tpu.trace_stop"() : () -> ()
    %65 = vector.shape_cast %64 : vector<1x8x8xf32> to vector<8x8xf32>
    %c8 = arith.constant 8 : index
    %c0_34 = arith.constant 0 : index
    %66 = vector.load %arg7[%c8, %c0_34] : memref<32x32xf32, #tpu.memory_space<vmem>>, vector<8x32xf32>
    %cst_35 = arith.constant dense<0.000000e+00> : vector<8x32xf32>
    %67 = tpu.matmul %65, %66, %cst_35 {dimension_numbers = #tpu.dot_dimension_numbers<[1], [0], [0], [1], [0, 0, 1, 1], [], []>} : vector<8x8xf32>, vector<8x32xf32>, vector<8x32xf32> -> vector<8x32xf32>
    %68 = arith.addf %43, %67 : vector<8x32xf32>
    %69 = vector.extract_strided_slice %16 {offsets = [0, 0, 16], sizes = [1, 8, 8], strides = [1, 1, 1]} : vector<1x8x32xf32> to vector<1x8x8xf32>
    %70 = vector.extract_strided_slice %17 {offsets = [0, 0, 16], sizes = [1, 8, 8], strides = [1, 1, 1]} : vector<1x8x64xf32> to vector<1x8x8xf32>
    %71 = vector.extract_strided_slice %17 {offsets = [0, 0, 48], sizes = [1, 8, 8], strides = [1, 1, 1]} : vector<1x8x64xf32> to vector<1x8x8xf32>
    "tpu.trace_start"() <{level = 10 : i32, message = "bnc,blc->bnl"}> : () -> ()
    %cst_36 = arith.constant dense<0.000000e+00> : vector<1x8x8xf32>
    %72 = tpu.matmul %69, %70, %cst_36 {dimension_numbers = #tpu.dot_dimension_numbers<[2], [2], [1], [1], [0, 0, 0, 1, 1, 1], [0], [0]>} : vector<1x8x8xf32>, vector<1x8x8xf32>, vector<1x8x8xf32> -> vector<1x8x8xf32>
    "tpu.trace_stop"() : () -> ()
    %cst_37 = arith.constant dense<0xFF800000> : vector<1x8xf32>
    %73 = vector.multi_reduction <maximumf>, %72, %cst_37 [2] : vector<1x8x8xf32> to vector<1x8xf32>
    %74 = vector.shape_cast %73 : vector<1x8xf32> to vector<1x8x1xf32>
    %75 = vector.broadcast %74 : vector<1x8x1xf32> to vector<1x8x8xf32>
    %76 = arith.subf %72, %75 : vector<1x8x8xf32>
    %77 = math.exp %76 : vector<1x8x8xf32>
    %cst_38 = arith.constant dense<0.000000e+00> : vector<1x8xf32>
    %78 = vector.multi_reduction <add>, %77, %cst_38 [2] : vector<1x8x8xf32> to vector<1x8xf32>
    %79 = vector.shape_cast %78 : vector<1x8xf32> to vector<1x8x1xf32>
    %80 = tpu.reciprocal %79 {approx = true} : vector<1x8x1xf32> -> vector<1x8x1xf32>
    %81 = arith.mulf %79, %80 : vector<1x8x1xf32>
    %cst_39 = arith.constant 2.000000e+00 : f32
    %82 = vector.broadcast %cst_39 : f32 to vector<1x8x1xf32>
    %83 = arith.subf %82, %81 : vector<1x8x1xf32>
    %84 = arith.mulf %80, %83 : vector<1x8x1xf32>
    %85 = vector.broadcast %84 : vector<1x8x1xf32> to vector<1x8x8xf32>
    %86 = arith.mulf %77, %85 : vector<1x8x8xf32>
    %87 = vector.extract_strided_slice %86 {offsets = [0, 0, 0], sizes = [1, 1, 8], strides = [1, 1, 1]} : vector<1x8x8xf32> to vector<1x1x8xf32>
    %c0_40 = arith.constant 0 : index
    %c2 = arith.constant 2 : index
    %c0_41 = arith.constant 0 : index
    %88 = vector.load %arg10[%c0_40, %c2, %c0_41] : memref<1x4x8xf32, #tpu.memory_space<vmem>>, vector<1x1x8xf32>
    tpu.vector_store %arg10[%c0_40, %c2, %c0_41], %87 {strides = array<i32>} : memref<1x4x8xf32, #tpu.memory_space<vmem>>, vector<1x1x8xf32>,
    "tpu.trace_start"() <{level = 10 : i32, message = "bnl,blc->bnc"}> : () -> ()
    %cst_42 = arith.constant dense<0.000000e+00> : vector<1x8x8xf32>
    %89 = tpu.matmul %86, %71, %cst_42 {dimension_numbers = #tpu.dot_dimension_numbers<[2], [1], [1], [2], [0, 0, 0, 1, 1, 2], [0], [0]>} : vector<1x8x8xf32>, vector<1x8x8xf32>, vector<1x8x8xf32> -> vector<1x8x8xf32>
    "tpu.trace_stop"() : () -> ()
    %90 = vector.shape_cast %89 : vector<1x8x8xf32> to vector<8x8xf32>
    %c16 = arith.constant 16 : index
    %c0_43 = arith.constant 0 : index
    %91 = vector.load %arg7[%c16, %c0_43] : memref<32x32xf32, #tpu.memory_space<vmem>>, vector<8x32xf32>
    %cst_44 = arith.constant dense<0.000000e+00> : vector<8x32xf32>
    %92 = tpu.matmul %90, %91, %cst_44 {dimension_numbers = #tpu.dot_dimension_numbers<[1], [0], [0], [1], [0, 0, 1, 1], [], []>} : vector<8x8xf32>, vector<8x32xf32>, vector<8x32xf32> -> vector<8x32xf32>
    %93 = arith.addf %68, %92 : vector<8x32xf32>
    %94 = vector.extract_strided_slice %16 {offsets = [0, 0, 24], sizes = [1, 8, 8], strides = [1, 1, 1]} : vector<1x8x32xf32> to vector<1x8x8xf32>
    %95 = vector.extract_strided_slice %17 {offsets = [0, 0, 24], sizes = [1, 8, 8], strides = [1, 1, 1]} : vector<1x8x64xf32> to vector<1x8x8xf32>
    %96 = vector.extract_strided_slice %17 {offsets = [0, 0, 56], sizes = [1, 8, 8], strides = [1, 1, 1]} : vector<1x8x64xf32> to vector<1x8x8xf32>
    "tpu.trace_start"() <{level = 10 : i32, message = "bnc,blc->bnl"}> : () -> ()
    %cst_45 = arith.constant dense<0.000000e+00> : vector<1x8x8xf32>
    %97 = tpu.matmul %94, %95, %cst_45 {dimension_numbers = #tpu.dot_dimension_numbers<[2], [2], [1], [1], [0, 0, 0, 1, 1, 1], [0], [0]>} : vector<1x8x8xf32>, vector<1x8x8xf32>, vector<1x8x8xf32> -> vector<1x8x8xf32>
    "tpu.trace_stop"() : () -> ()
    %cst_46 = arith.constant dense<0xFF800000> : vector<1x8xf32>
    %98 = vector.multi_reduction <maximumf>, %97, %cst_46 [2] : vector<1x8x8xf32> to vector<1x8xf32>
    %99 = vector.shape_cast %98 : vector<1x8xf32> to vector<1x8x1xf32>
    %100 = vector.broadcast %99 : vector<1x8x1xf32> to vector<1x8x8xf32>
    %101 = arith.subf %97, %100 : vector<1x8x8xf32>
    %102 = math.exp %101 : vector<1x8x8xf32>
    %cst_47 = arith.constant dense<0.000000e+00> : vector<1x8xf32>
    %103 = vector.multi_reduction <add>, %102, %cst_47 [2] : vector<1x8x8xf32> to vector<1x8xf32>
    %104 = vector.shape_cast %103 : vector<1x8xf32> to vector<1x8x1xf32>
    %105 = tpu.reciprocal %104 {approx = true} : vector<1x8x1xf32> -> vector<1x8x1xf32>
    %106 = arith.mulf %104, %105 : vector<1x8x1xf32>
    %cst_48 = arith.constant 2.000000e+00 : f32
    %107 = vector.broadcast %cst_48 : f32 to vector<1x8x1xf32>
    %108 = arith.subf %107, %106 : vector<1x8x1xf32>
    %109 = arith.mulf %105, %108 : vector<1x8x1xf32>
    %110 = vector.broadcast %109 : vector<1x8x1xf32> to vector<1x8x8xf32>
    %111 = arith.mulf %102, %110 : vector<1x8x8xf32>
    %112 = vector.extract_strided_slice %111 {offsets = [0, 0, 0], sizes = [1, 1, 8], strides = [1, 1, 1]} : vector<1x8x8xf32> to vector<1x1x8xf32>
    %c0_49 = arith.constant 0 : index
    %c3 = arith.constant 3 : index
    %c0_50 = arith.constant 0 : index
    %113 = vector.load %arg10[%c0_49, %c3, %c0_50] : memref<1x4x8xf32, #tpu.memory_space<vmem>>, vector<1x1x8xf32>
    tpu.vector_store %arg10[%c0_49, %c3, %c0_50], %112 {strides = array<i32>} : memref<1x4x8xf32, #tpu.memory_space<vmem>>, vector<1x1x8xf32>,
    "tpu.trace_start"() <{level = 10 : i32, message = "bnl,blc->bnc"}> : () -> ()
    %cst_51 = arith.constant dense<0.000000e+00> : vector<1x8x8xf32>
    %114 = tpu.matmul %111, %96, %cst_51 {dimension_numbers = #tpu.dot_dimension_numbers<[2], [1], [1], [2], [0, 0, 0, 1, 1, 2], [0], [0]>} : vector<1x8x8xf32>, vector<1x8x8xf32>, vector<1x8x8xf32> -> vector<1x8x8xf32>
    "tpu.trace_stop"() : () -> ()
    %115 = vector.shape_cast %114 : vector<1x8x8xf32> to vector<8x8xf32>
    %c24 = arith.constant 24 : index
    %c0_52 = arith.constant 0 : index
    %116 = vector.load %arg7[%c24, %c0_52] : memref<32x32xf32, #tpu.memory_space<vmem>>, vector<8x32xf32>
    %cst_53 = arith.constant dense<0.000000e+00> : vector<8x32xf32>
    %117 = tpu.matmul %115, %116, %cst_53 {dimension_numbers = #tpu.dot_dimension_numbers<[1], [0], [0], [1], [0, 0, 1, 1], [], []>} : vector<8x8xf32>, vector<8x32xf32>, vector<8x32xf32> -> vector<8x32xf32>
    %118 = arith.addf %93, %117 : vector<8x32xf32>
    %c0_54 = arith.constant 0 : index
    %c0_55 = arith.constant 0 : index
    %119 = vector.load %arg8[%c0_54, %c0_55] : memref<1x32xf32, #tpu.memory_space<vmem>>, vector<1x32xf32>
    %120 = vector.broadcast %119 : vector<1x32xf32> to vector<8x32xf32>
    %121 = arith.addf %118, %120 : vector<8x32xf32>
    %122 = vector.shape_cast %121 : vector<8x32xf32> to vector<1x8x32xf32>
    %c0_56 = arith.constant 0 : index
    %c0_57 = arith.constant 0 : index
    %c0_58 = arith.constant 0 : index
    %123 = vector.load %arg9[%c0_56, %c0_57, %c0_58] : memref<1x8x32xf32, #tpu.memory_space<vmem>>, vector<1x8x32xf32>
    tpu.vector_store %arg9[%c0_56, %c0_57, %c0_58], %122 {strides = array<i32>} : memref<1x8x32xf32, #tpu.memory_space<vmem>>, vector<1x8x32xf32>,
    return
  }
  func.func @transform_0(%arg0: i32) -> (i32, i32, i32) {
    %c0_i32 = arith.constant 0 : i32
    %c0_i32_0 = arith.constant 0 : i32
    %c0_i32_1 = arith.constant 0 : i32
    return %arg0, %c0_i32, %c0_i32_0 : i32, i32, i32
  }
  func.func @transform_1(%arg0: i32) -> (i32, i32, i32) {
    %c0_i32 = arith.constant 0 : i32
    %c0_i32_0 = arith.constant 0 : i32
    %c0_i32_1 = arith.constant 0 : i32
    return %arg0, %c0_i32, %c0_i32_0 : i32, i32, i32
  }
  func.func @transform_2(%arg0: i32) -> (i32, i32) {
    %c0_i32 = arith.constant 0 : i32
    %c0_i32_0 = arith.constant 0 : i32
    %c0_i32_1 = arith.constant 0 : i32
    return %c0_i32, %c0_i32_0 : i32, i32
  }
  func.func @transform_3(%arg0: i32) -> (i32, i32) {
    %c0_i32 = arith.constant 0 : i32
    %c0_i32_0 = arith.constant 0 : i32
    %c0_i32_1 = arith.constant 0 : i32
    return %c0_i32, %c0_i32_0 : i32, i32
  }
  func.func @transform_4(%arg0: i32) -> (i32, i32) {
    %c0_i32 = arith.constant 0 : i32
    %c0_i32_0 = arith.constant 0 : i32
    %c0_i32_1 = arith.constant 0 : i32
    return %c0_i32, %c0_i32_0 : i32, i32
  }
  func.func @transform_5(%arg0: i32) -> (i32, i32) {
    %c0_i32 = arith.constant 0 : i32
    %c0_i32_0 = arith.constant 0 : i32
    %c0_i32_1 = arith.constant 0 : i32
    return %c0_i32, %c0_i32_0 : i32, i32
  }
  func.func @transform_6(%arg0: i32) -> (i32, i32) {
    %c0_i32 = arith.constant 0 : i32
    %c0_i32_0 = arith.constant 0 : i32
    %c0_i32_1 = arith.constant 0 : i32
    return %c0_i32, %c0_i32_0 : i32, i32
  }
  func.func @transform_7(%arg0: i32) -> (i32, i32) {
    %c0_i32 = arith.constant 0 : i32
    %c0_i32_0 = arith.constant 0 : i32
    %c0_i32_1 = arith.constant 0 : i32
    return %c0_i32, %c0_i32_0 : i32, i32
  }
  func.func @transform_8(%arg0: i32) -> (i32, i32, i32) {
    %c0_i32 = arith.constant 0 : i32
    %c0_i32_0 = arith.constant 0 : i32
    %c0_i32_1 = arith.constant 0 : i32
    return %arg0, %c0_i32, %c0_i32_0 : i32, i32, i32
  }
  func.func @transform_9(%arg0: i32) -> (i32, i32, i32) {
    %c0_i32 = arith.constant 0 : i32
    %c0_i32_0 = arith.constant 0 : i32
    %c0_i32_1 = arith.constant 0 : i32
    return %arg0, %c0_i32, %c0_i32_0 : i32, i32, i32
  }
}

</mosaic_0001>

<llo_original>
// kernel: tpu_custom_call.1
$region0: #{tpu_custom_call.1}
  #allocation0 [shape = 'u32[]', space=smem, size = 0x4, offset = 0x4, fixed_abs, tag = 'smem constant byte address 0x4 - core index']
  #allocation1 [shape = 'u32[72,128]{1,0:T(1,128)}', space=vmem, size = 0x9000, scoped, tag = 'internal scratch']
  %s0 = inlined_call_operand.hbm [shape: f32[2,8,32], index: 0, kind: input, shape index: {}]
  %s1 = inlined_call_operand.hbm [shape: f32[2,8,32], index: 1, kind: input, shape index: {}]
  %s2 = inlined_call_operand.hbm [shape: f32[32,32], index: 2, kind: input, shape index: {}]
  %s3 = inlined_call_operand.vmem [shape: f32[1,32], index: 3, kind: input, shape index: {}]
  %s4 = inlined_call_operand.hbm [shape: f32[32,64], index: 4, kind: input, shape index: {}]
  %s5 = inlined_call_operand.vmem [shape: f32[1,64], index: 5, kind: input, shape index: {}]
  %s6 = inlined_call_operand.hbm [shape: f32[32,32], index: 6, kind: input, shape index: {}]
  %s7 = inlined_call_operand.vmem [shape: f32[1,32], index: 7, kind: input, shape index: {}]
  %s8 = inlined_call_operand.hbm [shape: f32[2,8,32], index: 8, kind: output, shape index: {0}]
  %s9 = inlined_call_operand.hbm [shape: f32[2,4,8], index: 9, kind: output, shape index: {1}]
  %10 = xla_tuple %s8, %s9
  %s11 = sld [smem:[#allocation0]]
  $region93: #{tpu_custom_call.1} parent=0
    _
  %s13 = ssub.s32 1, %s11
  %s14 = scalar_select 0, %s13, %s11
  $region1: #{tpu_custom_call.1} parent=0
    #allocation2 [shape = 'u8[8192]{0}', space=vmem, size = 0x2000, scoped, tag = 'input window, operand 0']
    #allocation3 [shape = 's32[2]{0}', space=sflag, size = 0x8, scoped, tag = 'scoped memory for tpu_custom_call.1']
    #allocation4 [shape = 's32[2]{0}', space=sflag, size = 0x8, scoped, tag = 'scoped memory for tpu_custom_call.1']
    #allocation5 [shape = 'u8[8192]{0}', space=vmem, size = 0x2000, scoped, tag = 'input window, operand 1']
    #allocation6 [shape = 's32[2]{0}', space=sflag, size = 0x8, scoped, tag = 'scoped memory for tpu_custom_call.1']
    #allocation7 [shape = 'u8[16384]{0}', space=vmem, size = 0x4000, scoped, tag = 'input window, operand 2, single buffered']
    #allocation8 [shape = 'u8[16384]{0}', space=vmem, size = 0x4000, scoped, tag = 'input window, operand 4, single buffered']
    #allocation9 [shape = 's32[1]{0}', space=sflag, size = 0x4, scoped, tag = 'scoped memory for tpu_custom_call.1']
    #allocation10 [shape = 'u8[16384]{0}', space=vmem, size = 0x4000, scoped, tag = 'input window, operand 6, single buffered']
    #allocation11 [shape = 'u8[8192]{0}', space=vmem, size = 0x2000, scoped, tag = 'output window, operand 0']
    #allocation12 [shape = 'u8[4096]{0}', space=vmem, size = 0x1000, scoped, tag = 'output window, operand 1']
    #allocation13 [shape = 's32[2]{0}', space=sflag, size = 0x8, scoped, tag = 'scoped memory for tpu_custom_call.1']
    %15 = vsyncpa [#allocation3], 0
    %s16 = scalar_lea.sflag [#allocation3], 1
    %17 = vsyncpa %s16, 0
    %18 = vsyncpa [#allocation6], 0
    %s19 = scalar_lea.sflag [#allocation6], 1
    %20 = vsyncpa %s19, 0
    %21 = vsyncpa [#allocation9], 0
    %22 = vsyncpa [#allocation4], 0
    %s23 = scalar_lea.sflag [#allocation4], 1
    %24 = vsyncpa %s23, 0
    %25 = vsyncpa [#allocation13], 0
    %s26 = scalar_lea.sflag [#allocation13], 1
    %27 = vsyncpa %s26, 0
    loop: start=0, step=1, limit=4
    $region2: #{tpu_custom_call.1} parent=1 // loop_pre_header
      _
    $region3: #{tpu_custom_call.1} parent=1 // loop_header
      %s29 = sphi 0, %s33
      %p30 = scmp.ge.s32.totalorder %s29, 4
      %s39 = sphi 0, %s41
      %s42 = sphi 0, %s39
      %s43 = sphi 0, %s42
      %s59 = sphi 0, %s43
      %s65 = sphi 0, %s67
      %s68 = sphi 0, %s65
      %s69 = sphi 0, %s68
      %s85 = sphi 0, %s69
      %s89 = sphi 0, %s89
      %s91 = sphi 0, %s89
      %s92 = sphi 0, %s91
      %s106 = sphi 0, %s92
      %s110 = sphi 0, %s110
      %s112 = sphi 0, %s110
      %s113 = sphi 0, %s112
      %s127 = sphi 0, %s113
      %s131 = sphi 0, %s131
      %s133 = sphi 0, %s131
      %s134 = sphi 0, %s133
      %s148 = sphi 0, %s134
      %s152 = sphi 0, %s152
      %s154 = sphi 0, %s152
      %s155 = sphi 0, %s154
      %s169 = sphi 0, %s155
      %s173 = sphi 0, %s173
      %s175 = sphi 0, %s173
      %s176 = sphi 0, %s175
      %s190 = sphi 0, %s176
      %s194 = sphi 0, %s194
      %s196 = sphi 0, %s194
      %s197 = sphi 0, %s196
      %s211 = sphi 0, %s197
      %s217 = sphi 0, %s219
      %s220 = sphi 0, %s217
      %s221 = sphi 0, %s220
      %s237 = sphi 0, %s221
      %s243 = sphi 0, %s245
      %s246 = sphi 0, %s243
      %s247 = sphi 0, %s246
      %s263 = sphi 0, %s247
    $region4: #{tpu_custom_call.1} parent=1 // loop_header_branch
      %32 = sbr.rel (%p30) target = $region8
    $region5: #{tpu_custom_call.1} parent=1 // loop_body
      %s34 = ssub.s32 %s29, 1
      %s35 = ssub.s32 %s29, 2
      %s36 = sadd.s32 %s29, 1
      %s37 = ssub.s32 %s29, %s36
      %p38 = scmp.eq.s32.totalorder %s37, 0
      %s40 = sadd.s32 %s39, 1
      %s41 = scalar_select %p38, %s39, %s40
      %p44 = pneg %p38
      %p45 = scmp.eq.s32.totalorder %s29, 1
      %p46 = por %p44, %p45
      %p47 = scmp.ne.s32.totalorder %s39, %s42
      %p48 = scmp.eq.s32.totalorder %s29, 0
      %p49 = por %p47, %p48
      %p50 = scmp.ne.s32.totalorder %s39, %s42
      %p51 = scmp.eq.s32.totalorder %s34, 1
      %p52 = por %p50, %p51
      %p53 = scmp.ne.s32.totalorder %s42, %s43
      %p54 = scmp.eq.s32.totalorder %s34, 0
      %p55 = por %p53, %p54
      %p56 = scmp.ne.s32.totalorder %s42, %s43
      %p57 = scmp.eq.s32.totalorder %s35, 1
      %p58 = por %p56, %p57
      %p60 = scmp.ne.s32.totalorder %s43, %s59
      %p61 = scmp.eq.s32.totalorder %s35, 0
      %p62 = por %p60, %p61
      %s63 = ssub.s32 %s29, %s36
      %p64 = scmp.eq.s32.totalorder %s63, 0
      %s66 = sadd.s32 %s65, 1
      %s67 = scalar_select %p64, %s65, %s66
      %p70 = pneg %p64
      %p71 = scmp.eq.s32.totalorder %s29, 1
      %p72 = por %p70, %p71
      %p73 = scmp.ne.s32.totalorder %s65, %s68
      %p74 = scmp.eq.s32.totalorder %s29, 0
      %p75 = por %p73, %p74
      %p76 = scmp.ne.s32.totalorder %s65, %s68
      %p77 = scmp.eq.s32.totalorder %s34, 1
      %p78 = por %p76, %p77
      %p79 = scmp.ne.s32.totalorder %s68, %s69
      %p80 = scmp.eq.s32.totalorder %s34, 0
      %p81 = por %p79, %p80
      %p82 = scmp.ne.s32.totalorder %s68, %s69
      %p83 = scmp.eq.s32.totalorder %s35, 1
      %p84 = por %p82, %p83
      %p86 = scmp.ne.s32.totalorder %s69, %s85
      %p87 = scmp.eq.s32.totalorder %s35, 0
      %p88 = por %p86, %p87
      %s90 = sadd.s32 %s89, 1
      %p93 = scmp.eq.s32.totalorder %s29, 1
      %p94 = scmp.ne.s32.totalorder %s89, %s91
      %p95 = scmp.eq.s32.totalorder %s29, 0
      %p96 = por %p94, %p95
      %p97 = scmp.ne.s32.totalorder %s89, %s91
      %p98 = scmp.eq.s32.totalorder %s34, 1
      %p99 = por %p97, %p98
      %p100 = scmp.ne.s32.totalorder %s91, %s92
      %p101 = scmp.eq.s32.totalorder %s34, 0
      %p102 = por %p100, %p101
      %p103 = scmp.ne.s32.totalorder %s91, %s92
      %p104 = scmp.eq.s32.totalorder %s35, 1
      %p105 = por %p103, %p104
      %p107 = scmp.ne.s32.totalorder %s92, %s106
      %p108 = scmp.eq.s32.totalorder %s35, 0
      %p109 = por %p107, %p108
      %s111 = sadd.s32 %s110, 1
      %p114 = scmp.eq.s32.totalorder %s29, 1
      %p115 = scmp.ne.s32.totalorder %s110, %s112
      %p116 = scmp.eq.s32.totalorder %s29, 0
      %p117 = por %p115, %p116
      %p118 = scmp.ne.s32.totalorder %s110, %s112
      %p119 = scmp.eq.s32.totalorder %s34, 1
      %p120 = por %p118, %p119
      %p121 = scmp.ne.s32.totalorder %s112, %s113
      %p122 = scmp.eq.s32.totalorder %s34, 0
      %p123 = por %p121, %p122
      %p124 = scmp.ne.s32.totalorder %s112, %s113
      %p125 = scmp.eq.s32.totalorder %s35, 1
      %p126 = por %p124, %p125
      %p128 = scmp.ne.s32.totalorder %s113, %s127
      %p129 = scmp.eq.s32.totalorder %s35, 0
      %p130 = por %p128, %p129
      %s132 = sadd.s32 %s131, 1
      %p135 = scmp.eq.s32.totalorder %s29, 1
      %p136 = scmp.ne.s32.totalorder %s131, %s133
      %p137 = scmp.eq.s32.totalorder %s29, 0
      %p138 = por %p136, %p137
      %p139 = scmp.ne.s32.totalorder %s131, %s133
      %p140 = scmp.eq.s32.totalorder %s34, 1
      %p141 = por %p139, %p140
      %p142 = scmp.ne.s32.totalorder %s133, %s134
      %p143 = scmp.eq.s32.totalorder %s34, 0
      %p144 = por %p142, %p143
      %p145 = scmp.ne.s32.totalorder %s133, %s134
      %p146 = scmp.eq.s32.totalorder %s35, 1
      %p147 = por %p145, %p146
      %p149 = scmp.ne.s32.totalorder %s134, %s148
      %p150 = scmp.eq.s32.totalorder %s35, 0
      %p151 = por %p149, %p150
      %s153 = sadd.s32 %s152, 1
      %p156 = scmp.eq.s32.totalorder %s29, 1
      %p157 = scmp.ne.s32.totalorder %s152, %s154
      %p158 = scmp.eq.s32.totalorder %s29, 0
      %p159 = por %p157, %p158
      %p160 = scmp.ne.s32.totalorder %s152, %s154
      %p161 = scmp.eq.s32.totalorder %s34, 1
      %p162 = por %p160, %p161
      %p163 = scmp.ne.s32.totalorder %s154, %s155
      %p164 = scmp.eq.s32.totalorder %s34, 0
      %p165 = por %p163, %p164
      %p166 = scmp.ne.s32.totalorder %s154, %s155
      %p167 = scmp.eq.s32.totalorder %s35, 1
      %p168 = por %p166, %p167
      %p170 = scmp.ne.s32.totalorder %s155, %s169
      %p171 = scmp.eq.s32.totalorder %s35, 0
      %p172 = por %p170, %p171
      %s174 = sadd.s32 %s173, 1
      %p177 = scmp.eq.s32.totalorder %s29, 1
      %p178 = scmp.ne.s32.totalorder %s173, %s175
      %p179 = scmp.eq.s32.totalorder %s29, 0
      %p180 = por %p178, %p179
      %p181 = scmp.ne.s32.totalorder %s173, %s175
      %p182 = scmp.eq.s32.totalorder %s34, 1
      %p183 = por %p181, %p182
      %p184 = scmp.ne.s32.totalorder %s175, %s176
      %p185 = scmp.eq.s32.totalorder %s34, 0
      %p186 = por %p184, %p185
      %p187 = scmp.ne.s32.totalorder %s175, %s176
      %p188 = scmp.eq.s32.totalorder %s35, 1
      %p189 = por %p187, %p188
      %p191 = scmp.ne.s32.totalorder %s176, %s190
      %p192 = scmp.eq.s32.totalorder %s35, 0
      %p193 = por %p191, %p192
      %s195 = sadd.s32 %s194, 1
      %p198 = scmp.eq.s32.totalorder %s29, 1
      %p199 = scmp.ne.s32.totalorder %s194, %s196
      %p200 = scmp.eq.s32.totalorder %s29, 0
      %p201 = por %p199, %p200
      %p202 = scmp.ne.s32.totalorder %s194, %s196
      %p203 = scmp.eq.s32.totalorder %s34, 1
      %p204 = por %p202, %p203
      %p205 = scmp.ne.s32.totalorder %s196, %s197
      %p206 = scmp.eq.s32.totalorder %s34, 0
      %p207 = por %p205, %p206
      %p208 = scmp.ne.s32.totalorder %s196, %s197
      %p209 = scmp.eq.s32.totalorder %s35, 1
      %p210 = por %p208, %p209
      %p212 = scmp.ne.s32.totalorder %s197, %s211
      %p213 = scmp.eq.s32.totalorder %s35, 0
      %p214 = por %p212, %p213
      %s215 = ssub.s32 %s29, %s36
      %p216 = scmp.eq.s32.totalorder %s215, 0
      %s218 = sadd.s32 %s217, 1
      %s219 = scalar_select %p216, %s217, %s218
      %p222 = pneg %p216
      %p223 = scmp.eq.s32.totalorder %s29, 1
      %p224 = por %p222, %p223
      %p225 = scmp.ne.s32.totalorder %s217, %s220
      %p226 = scmp.eq.s32.totalorder %s29, 0
      %p227 = por %p225, %p226
      %p228 = scmp.ne.s32.totalorder %s217, %s220
      %p229 = scmp.eq.s32.totalorder %s34, 1
      %p230 = por %p228, %p229
      %p231 = scmp.ne.s32.totalorder %s220, %s221
      %p232 = scmp.eq.s32.totalorder %s34, 0
      %p233 = por %p231, %p232
      %p234 = scmp.ne.s32.totalorder %s220, %s221
      %p235 = scmp.eq.s32.totalorder %s35, 1
      %p236 = por %p234, %p235
      %p238 = scmp.ne.s32.totalorder %s221, %s237
      %p239 = scmp.eq.s32.totalorder %s35, 0
      %p240 = por %p238, %p239
      %s241 = ssub.s32 %s29, %s36
      %p242 = scmp.eq.s32.totalorder %s241, 0
      %s244 = sadd.s32 %s243, 1
      %s245 = scalar_select %p242, %s243, %s244
      %p248 = pneg %p242
      %p249 = scmp.eq.s32.totalorder %s29, 1
      %p250 = por %p248, %p249
      %p251 = scmp.ne.s32.totalorder %s243, %s246
      %p252 = scmp.eq.s32.totalorder %s29, 0
      %p253 = por %p251, %p252
      %p254 = scmp.ne.s32.totalorder %s243, %s246
      %p255 = scmp.eq.s32.totalorder %s34, 1
      %p256 = por %p254, %p255
      %p257 = scmp.ne.s32.totalorder %s246, %s247
      %p258 = scmp.eq.s32.totalorder %s34, 0
      %p259 = por %p257, %p258
      %p260 = scmp.ne.s32.totalorder %s246, %s247
      %p261 = scmp.eq.s32.totalorder %s35, 1
      %p262 = por %p260, %p261
      %p264 = scmp.ne.s32.totalorder %s247, %s263
      %p265 = scmp.eq.s32.totalorder %s35, 0
      %p266 = por %p264, %p265
      %p267 = scmp.le.s32.totalorder 1, %s29
      %p268 = scmp.lt.s32.totalorder %s29, 3
      %p269 = pnand %p267, %p268
      %p270 = pneg %p269
      // Predicated region
      $region9: #{tpu_custom_call.1} parent=5 // pred_check
        _
      $region10: #{tpu_custom_call.1} parent=5 // pred_check_branch
        %272 = sbr.rel (%p269) target = $region12
      $region11: #{tpu_custom_call.1} parent=5 // pred_region
        %s273 = ssub.s32 %s29, 1
        // Predicated region
        $region13: #{tpu_custom_call.1} parent=11 // pred_check
          %p274 = pneg %p102
        $region14: #{tpu_custom_call.1} parent=11 // pred_check_branch
          %276 = sbr.rel (%p274) target = $region16
        $region15: #{tpu_custom_call.1} parent=11 // pred_region
          %278 = vsyncadd [#allocation6], 0
          %s279 = sshll.u32 %s2, 4
          %s280 = int_to_ptr.hbm [resolvable:$true] %s279
          %s281 = sshll.u32 [#allocation7], 4
          %s282 = int_to_ptr.vmem [resolvable:$true] %s281
          %287 = dma.hbm_to_vmem [thread:$0]  %s280, 512, %s282, [#allocation6], 128, 128, 8
        $region16: #{tpu_custom_call.1} parent=11 // pred_fallthru
          _
        // Predicated region
        $region17: #{tpu_custom_call.1} parent=11 // pred_check
          %p288 = pneg %p123
        $region18: #{tpu_custom_call.1} parent=11 // pred_check_branch
          %290 = sbr.rel (%p288) target = $region20
        $region19: #{tpu_custom_call.1} parent=11 // pred_region
          _
        $region20: #{tpu_custom_call.1} parent=11 // pred_fallthru
          _
        // Predicated region
        $region21: #{tpu_custom_call.1} parent=11 // pred_check
          %p291 = pneg %p144
        $region22: #{tpu_custom_call.1} parent=11 // pred_check_branch
          %293 = sbr.rel (%p291) target = $region24
        $region23: #{tpu_custom_call.1} parent=11 // pred_region
          %295 = vsyncadd [#allocation9], 0
          %s296 = sshll.u32 %s4, 4
          %s297 = int_to_ptr.hbm [resolvable:$true] %s296
          %s298 = sshll.u32 [#allocation8], 4
          %s299 = int_to_ptr.vmem [resolvable:$true] %s298
          %304 = dma.hbm_to_vmem [thread:$0]  %s297, 512, %s299, [#allocation9], 128, 128, 8
        $region24: #{tpu_custom_call.1} parent=11 // pred_fallthru
          _
        // Predicated region
        $region25: #{tpu_custom_call.1} parent=11 // pred_check
          %p305 = pneg %p165
        $region26: #{tpu_custom_call.1} parent=11 // pred_check_branch
          %307 = sbr.rel (%p305) target = $region28
        $region27: #{tpu_custom_call.1} parent=11 // pred_region
          _
        $region28: #{tpu_custom_call.1} parent=11 // pred_fallthru
          _
        // Predicated region
        $region29: #{tpu_custom_call.1} parent=11 // pred_check
          %p308 = pneg %p186
        $region30: #{tpu_custom_call.1} parent=11 // pred_check_branch
          %310 = sbr.rel (%p308) target = $region32
        $region31: #{tpu_custom_call.1} parent=11 // pred_region
          %312 = vsyncadd [#allocation9], 0
          %s313 = sshll.u32 %s6, 4
          %s314 = int_to_ptr.hbm [resolvable:$true] %s313
          %s315 = sshll.u32 [#allocation10], 4
          %s316 = int_to_ptr.vmem [resolvable:$true] %s315
          %321 = dma.hbm_to_vmem [thread:$0]  %s314, 512, %s316, [#allocation9], 128, 128, 8
        $region32: #{tpu_custom_call.1} parent=11 // pred_fallthru
          _
        // Predicated region
        $region33: #{tpu_custom_call.1} parent=11 // pred_check
          %p322 = pneg %p207
        $region34: #{tpu_custom_call.1} parent=11 // pred_check_branch
          %324 = sbr.rel (%p322) target = $region36
        $region35: #{tpu_custom_call.1} parent=11 // pred_region
          _
        $region36: #{tpu_custom_call.1} parent=11 // pred_fallthru
          _
      $region12: #{tpu_custom_call.1} parent=5 // pred_fallthru
        _
      %p325 = scmp.lt.s32.totalorder %s29, 2
      // Predicated region
      $region37: #{tpu_custom_call.1} parent=5 // pred_check
        %p326 = pneg %p325
      $region38: #{tpu_custom_call.1} parent=5 // pred_check_branch
        %328 = sbr.rel (%p326) target = $region40
      $region39: #{tpu_custom_call.1} parent=5 // pred_region
        // Predicated region
        $region41: #{tpu_custom_call.1} parent=39 // pred_check
          %p329 = pneg %p49
        $region42: #{tpu_custom_call.1} parent=39 // pred_check_branch
          %331 = sbr.rel (%p329) target = $region44
        $region43: #{tpu_custom_call.1} parent=39 // pred_region
          %s332 = sand.u32 %s39, 1
          %s333 = scalar_lea.sflag [#allocation3], %s332
          %s334 = sand.u32 %s39, 1
          %s335 = smul.addr %s334, 8
          %s336 = scalar_lea.vmem [#allocation2], %s335
          %338 = vsyncadd %s333, 0
          %s339 = smul.addr %s29, 8
          %s340 = scalar_lea.hbm %s0, %s339
          %s342 = sshll.u32 %s340, 4
          %s343 = int_to_ptr.hbm [resolvable:$true] %s342
          %s344 = sshll.u32 %s336, 4
          %s345 = int_to_ptr.vmem [resolvable:$true] %s344
          %347 = dma.hbm_to_vmem [thread:$0]  %s343, 128, %s345, %s333
        $region44: #{tpu_custom_call.1} parent=39 // pred_fallthru
          _
        // Predicated region
        $region45: #{tpu_custom_call.1} parent=39 // pred_check
          %p348 = pneg %p75
        $region46: #{tpu_custom_call.1} parent=39 // pred_check_branch
          %350 = sbr.rel (%p348) target = $region48
        $region47: #{tpu_custom_call.1} parent=39 // pred_region
          %s351 = sand.u32 %s29, 1
          %s352 = scalar_lea.sflag [#allocation6], %s351
          %s353 = sand.u32 %s65, 1
          %s354 = smul.addr %s353, 8
          %s355 = scalar_lea.vmem [#allocation5], %s354
          %357 = vsyncadd %s352, 0
          %s358 = smul.addr %s29, 8
          %s359 = scalar_lea.hbm %s1, %s358
          %s361 = sshll.u32 %s359, 4
          %s362 = int_to_ptr.hbm [resolvable:$true] %s361
          %s363 = sshll.u32 %s355, 4
          %s364 = int_to_ptr.vmem [resolvable:$true] %s363
          %366 = dma.hbm_to_vmem [thread:$0]  %s362, 128, %s364, %s352
        $region48: #{tpu_custom_call.1} parent=39 // pred_fallthru
          _
      $region40: #{tpu_custom_call.1} parent=5 // pred_fallthru
        _
      %p367 = scmp.le.s32.totalorder 1, %s29
      %p368 = scmp.lt.s32.totalorder %s29, 3
      %p369 = pnand %p367, %p368
      %p370 = pneg %p369
      // Predicated region
      $region49: #{tpu_custom_call.1} parent=5 // pred_check
        _
      $region50: #{tpu_custom_call.1} parent=5 // pred_check_branch
        %372 = sbr.rel (%p369) target = $region52
      $region51: #{tpu_custom_call.1} parent=5 // pred_region
        %s373 = ssub.s32 %s29, 1
        %s374 = sand.u32 %s42, 1
        %s375 = scalar_lea.sflag [#allocation3], %s374
        %s376 = sand.u32 %s42, 1
        %s377 = smul.addr %s376, 8
        %s378 = scalar_lea.vmem [#allocation2], %s377
        // Predicated region
        $region53: #{tpu_custom_call.1} parent=51 // pred_check
          %p379 = pneg %p55
        $region54: #{tpu_custom_call.1} parent=51 // pred_check_branch
          %381 = sbr.rel (%p379) target = $region56
        $region55: #{tpu_custom_call.1} parent=51 // pred_region
          %383 = dma.done %s375, 128
        $region56: #{tpu_custom_call.1} parent=51 // pred_fallthru
          _
        %s384 = sand.u32 %s34, 1
        %s385 = scalar_lea.sflag [#allocation6], %s384
        %s386 = sand.u32 %s68, 1
        %s387 = smul.addr %s386, 8
        %s388 = scalar_lea.vmem [#allocation5], %s387
        // Predicated region
        $region57: #{tpu_custom_call.1} parent=51 // pred_check
          %p389 = pneg %p81
        $region58: #{tpu_custom_call.1} parent=51 // pred_check_branch
          %391 = sbr.rel (%p389) target = $region60
        $region59: #{tpu_custom_call.1} parent=51 // pred_region
          %393 = dma.done %s385, 128
        $region60: #{tpu_custom_call.1} parent=51 // pred_fallthru
          _
        // Predicated region
        $region61: #{tpu_custom_call.1} parent=51 // pred_check
          %p394 = pneg %p102
        $region62: #{tpu_custom_call.1} parent=51 // pred_check_branch
          %396 = sbr.rel (%p394) target = $region64
        $region63: #{tpu_custom_call.1} parent=51 // pred_region
          %398 = dma.done [#allocation6], 512
        $region64: #{tpu_custom_call.1} parent=51 // pred_fallthru
          _
        // Predicated region
        $region65: #{tpu_custom_call.1} parent=51 // pred_check
          %p399 = pneg %p144
        $region66: #{tpu_custom_call.1} parent=51 // pred_check_branch
          %401 = sbr.rel (%p399) target = $region68
        $region67: #{tpu_custom_call.1} parent=51 // pred_region
          %403 = dma.done [#allocation9], 512
        $region68: #{tpu_custom_call.1} parent=51 // pred_fallthru
          _
        // Predicated region
        $region69: #{tpu_custom_call.1} parent=51 // pred_check
          %p404 = pneg %p186
        $region70: #{tpu_custom_call.1} parent=51 // pred_check_branch
          %406 = sbr.rel (%p404) target = $region72
        $region71: #{tpu_custom_call.1} parent=51 // pred_region
          %408 = dma.done [#allocation9], 512
        $region72: #{tpu_custom_call.1} parent=51 // pred_fallthru
          _
        %s409 = sand.u32 %s42, 1
        %s410 = scalar_lea.sflag [#allocation3], %s409
        %s411 = sand.u32 %s42, 1
        %s412 = smul.addr %s411, 8
        %s413 = scalar_lea.vmem [#allocation2], %s412
        %p414 = pneg %p55
        %p415 = pneg %p52
        %s416 = sand.u32 %s34, 1
        %s417 = scalar_lea.sflag [#allocation6], %s416
        %s418 = sand.u32 %s68, 1
        %s419 = smul.addr %s418, 8
        %s420 = scalar_lea.vmem [#allocation5], %s419
        %p421 = pneg %p81
        %p422 = pneg %p78
        %p423 = pneg %p102
        %p424 = pneg %p99
        %p425 = pneg %p123
        %p426 = pneg %p120
        %p427 = pneg %p144
        %p428 = pneg %p141
        %p429 = pneg %p165
        %p430 = pneg %p162
        %p431 = pneg %p186
        %p432 = pneg %p183
        %p433 = pneg %p207
        %p434 = pneg %p204
        %p435 = pneg %p233
        %p436 = pneg %p230
        %s437 = sand.u32 %s220, 1
        %s438 = scalar_lea.sflag [#allocation4], %s437
        %s439 = sand.u32 %s220, 1
        %s440 = smul.addr %s439, 8
        %s441 = scalar_lea.vmem [#allocation11], %s440
        %p442 = pneg %p259
        %p443 = pneg %p256
        %s444 = sand.u32 %s246, 1
        %s445 = scalar_lea.sflag [#allocation13], %s444
        %s446 = sand.u32 %s246, 1
        %s447 = smul.addr %s446, 4
        %s448 = scalar_lea.vmem [#allocation12], %s447
        %v449 = vld [vmem:[%s378] sm:$0xff]
        %v450 = vld [vmem:[%s388] sm:$0xff]
        %v451 = vld [vmem:[#allocation7] sm:$0xff]
        %v452 = vld [vmem:[#allocation7 + $0x8] sm:$0xff]
        %v453 = vld [vmem:[#allocation7 + $0x10] sm:$0xff]
        %v454 = vld [vmem:[#allocation7 + $0x18] sm:$0xff]
        %v455 = vld [vmem:[%s3] sm:$0x1]
        %v457 = vperm.slane %v455, 0
        %vm459 = vcmask 261120
        %v461 = vsel %vm459, %v449, 0
        %463 = vmatpush.msra.mxu0 0.0
        %464 = vmatpush.msra.mxu0 0.0
        %465 = vmatpush.msra.mxu0 0.0
        %466 = vmatpush.msra.mxu0 0.0
        %467 = vmatpush.msra.mxu0 0.0
        %468 = vmatpush.msra.mxu0 0.0
        %469 = vmatpush.msra.mxu0 0.0
        %470 = vmatpush.msra.mxu0 0.0
        %471 = vmatpush.msra.mxu0 0.0
        %472 = vmatpush.msra.mxu0 0.0
        %473 = vmatpush.msra.mxu0 0.0
        %474 = vmatpush.msra.mxu0 0.0
        %475 = vmatpush.msra.mxu0 %v454
        %476 = vmatpush.msra.mxu0 %v453
        %477 = vmatpush.msra.mxu0 %v452
        %478 = vmatpush.msra.mxu0 %v451
        %479 = vmatmul.f32.gmra.mxu0 %v461
        %v480 = vpop.f32.mrf.mxu0
        %v481 = vadd.f32 %v457, %v480
        %482 = vdwg.mxu0
        %v483 = vld [vmem:[#allocation8] sm:$0xff]
        %v484 = vld [vmem:[#allocation8 + $0x8] sm:$0xff]
        %v485 = vld [vmem:[#allocation8 + $0x10] sm:$0xff]
        %v486 = vld [vmem:[#allocation8 + $0x18] sm:$0xff]
        %v487 = vld [vmem:[%s5] sm:$0x1]
        %v489 = vperm.slane %v487, 0
        %v492 = vsel %vm459, %v450, 0
        %494 = vmatpush.msra.mxu0 0.0
        %495 = vmatpush.msra.mxu0 0.0
        %496 = vmatpush.msra.mxu0 0.0
        %497 = vmatpush.msra.mxu0 0.0
        %498 = vmatpush.msra.mxu0 0.0
        %499 = vmatpush.msra.mxu0 0.0
        %500 = vmatpush.msra.mxu0 0.0
        %501 = vmatpush.msra.mxu0 0.0
        %502 = vmatpush.msra.mxu0 0.0
        %503 = vmatpush.msra.mxu0 0.0
        %504 = vmatpush.msra.mxu0 0.0
        %505 = vmatpush.msra.mxu0 0.0
        %506 = vmatpush.msra.mxu0 %v486
        %507 = vmatpush.msra.mxu0 %v485
        %508 = vmatpush.msra.mxu0 %v484
        %509 = vmatpush.msra.mxu0 %v483
        %510 = vmatmul.f32.gmra.mxu0 %v492
        %v511 = vpop.f32.mrf.mxu0
        %v512 = vadd.f32 %v489, %v511
        %513 = vdwg.mxu0
        %v514 = vmul.f32 %v481, 0.35355338
        %vm515 = vcmask 64512
        %v517 = vsel %vm515, %v514, 0
        %v520 = vsel %vm515, %v512, 0
        %522 = vmatpush.xpose.msra.mxu0 0.0
        %523 = vmatpush.xpose.msra.mxu0 0.0
        %524 = vmatpush.xpose.msra.mxu0 0.0
        %525 = vmatpush.xpose.msra.mxu0 0.0
        %526 = vmatpush.xpose.msra.mxu0 0.0
        %527 = vmatpush.xpose.msra.mxu0 0.0
        %528 = vmatpush.xpose.msra.mxu0 0.0
        %529 = vmatpush.xpose.msra.mxu0 0.0
        %530 = vmatpush.xpose.msra.mxu0 0.0
        %531 = vmatpush.xpose.msra.mxu0 0.0
        %532 = vmatpush.xpose.msra.mxu0 0.0
        %533 = vmatpush.xpose.msra.mxu0 0.0
        %534 = vmatpush.xpose.msra.mxu0 0.0
        %535 = vmatpush.xpose.msra.mxu0 0.0
        %536 = vmatpush.xpose.msra.mxu0 0.0
        %537 = vmatpush.xpose.msra.mxu0 %v520
        %538 = vmatmul.f32.gmra.mxu0 %v517
        %v539 = vpop.f32.mrf.mxu0
        %v540 = vadd.f32 0.0, %v539
        %541 = vdwg.mxu0
        %v542 = vsel %vm515, %v540, -inf
        %543 = vmax.xlane.f32.xlu0 %v542
        %v544 = vpop.xlane.xlu0 %543
        %v545 = vsub.f32 %v540, %v544
        %v546 = vmul.f32 %v545, 1.442695
        %v547 = vpow.pop %v546
        %v548 = vsel %vm515, %v547, 0.0
        %549 = vadd.xlane.f32.xlu0 %v548
        %v550 = vpop.xlane.xlu0 %549
        %v551 = vrcp.pop %v550
        %v552 = vmul.f32 %v550, %v551
        %v553 = vsub.f32 2.0, %v552
        %v554 = vmul.f32 %v551, %v553
        %v555 = vmul.f32 %v547, %v554
        %vm556 = vcmask 57344
        %557 = vst.msk [vmem:[%s448] sm:$0x1] %vm556, %v555
        %558 = vrot.lane.b32.xlu0 %v512, 96
        %v559 = vpop.permute.xlu0 %558
        %v562 = vsel %vm515, %v555, 0
        %564 = vmatpush.msra.mxu0 0.0
        %565 = vmatpush.msra.mxu0 0.0
        %566 = vmatpush.msra.mxu0 0.0
        %567 = vmatpush.msra.mxu0 0.0
        %568 = vmatpush.msra.mxu0 0.0
        %569 = vmatpush.msra.mxu0 0.0
        %570 = vmatpush.msra.mxu0 0.0
        %571 = vmatpush.msra.mxu0 0.0
        %572 = vmatpush.msra.mxu0 0.0
        %573 = vmatpush.msra.mxu0 0.0
        %574 = vmatpush.msra.mxu0 0.0
        %575 = vmatpush.msra.mxu0 0.0
        %576 = vmatpush.msra.mxu0 0.0
        %577 = vmatpush.msra.mxu0 0.0
        %578 = vmatpush.msra.mxu0 0.0
        %579 = vmatpush.msra.mxu0 %v559
        %580 = vmatmul.f32.gmra.mxu0 %v562
        %v581 = vpop.f32.mrf.mxu0
        %v582 = vadd.f32 0.0, %v581
        %583 = vdwg.mxu0
        %v584 = vld [vmem:[#allocation10] sm:$0xff]
        %585 = vrot.lane.b32.xlu0 %v514, 120
        %v586 = vpop.permute.xlu0 %585
        %587 = vrot.lane.b32.xlu0 %v512, 120
        %v588 = vpop.permute.xlu0 %587
        %v589 = vsel %vm515, %v586, 0
        %v591 = vsel %vm515, %v588, 0
        %593 = vmatpush.xpose.msra.mxu0 0.0
        %594 = vmatpush.xpose.msra.mxu0 0.0
        %595 = vmatpush.xpose.msra.mxu0 0.0
        %596 = vmatpush.xpose.msra.mxu0 0.0
        %597 = vmatpush.xpose.msra.mxu0 0.0
        %598 = vmatpush.xpose.msra.mxu0 0.0
        %599 = vmatpush.xpose.msra.mxu0 0.0
        %600 = vmatpush.xpose.msra.mxu0 0.0
        %601 = vmatpush.xpose.msra.mxu0 0.0
        %602 = vmatpush.xpose.msra.mxu0 0.0
        %603 = vmatpush.xpose.msra.mxu0 0.0
        %604 = vmatpush.xpose.msra.mxu0 0.0
        %605 = vmatpush.xpose.msra.mxu0 0.0
        %606 = vmatpush.xpose.msra.mxu0 0.0
        %607 = vmatpush.xpose.msra.mxu0 0.0
        %608 = vmatpush.xpose.msra.mxu0 %v591
        %609 = vmatmul.f32.gmra.mxu0 %v589
        %v610 = vpop.f32.mrf.mxu0
        %v611 = vadd.f32 0.0, %v610
        %612 = vdwg.mxu0
        %v613 = vsel %vm515, %v611, -inf
        %614 = vmax.xlane.f32.xlu0 %v613
        %v615 = vpop.xlane.xlu0 %614
        %v616 = vsub.f32 %v611, %v615
        %v617 = vmul.f32 %v616, 1.442695
        %v618 = vpow.pop %v617
        %v619 = vsel %vm515, %v618, 0.0
        %620 = vadd.xlane.f32.xlu0 %v619
        %v621 = vpop.xlane.xlu0 %620
        %v622 = vrcp.pop %v621
        %v623 = vmul.f32 %v621, %v622
        %v624 = vsub.f32 2.0, %v623
        %v625 = vmul.f32 %v622, %v624
        %v626 = vmul.f32 %v618, %v625
        %627 = vst.msk [vmem:[%s448 + $0x1] sm:$0x1] %vm556, %v626
        %628 = vrot.lane.b32.xlu0 %v512, 88
        %v629 = vpop.permute.xlu0 %628
        %v632 = vsel %vm515, %v626, 0
        %634 = vmatpush.msra.mxu0 0.0
        %635 = vmatpush.msra.mxu0 0.0
        %636 = vmatpush.msra.mxu0 0.0
        %637 = vmatpush.msra.mxu0 0.0
        %638 = vmatpush.msra.mxu0 0.0
        %639 = vmatpush.msra.mxu0 0.0
        %640 = vmatpush.msra.mxu0 0.0
        %641 = vmatpush.msra.mxu0 0.0
        %642 = vmatpush.msra.mxu0 0.0
        %643 = vmatpush.msra.mxu0 0.0
        %644 = vmatpush.msra.mxu0 0.0
        %645 = vmatpush.msra.mxu0 0.0
        %646 = vmatpush.msra.mxu0 0.0
        %647 = vmatpush.msra.mxu0 0.0
        %648 = vmatpush.msra.mxu0 0.0
        %649 = vmatpush.msra.mxu0 %v629
        %650 = vmatmul.f32.gmra.mxu0 %v632
        %v651 = vpop.f32.mrf.mxu0
        %v652 = vadd.f32 0.0, %v651
        %653 = vdwg.mxu0
        %v654 = vld [vmem:[#allocation10 + $0x8] sm:$0xff]
        %v656 = vsel %vm515, %v652, 0
        %658 = vmatpush.msra.mxu0 0.0
        %659 = vmatpush.msra.mxu0 0.0
        %660 = vmatpush.msra.mxu0 0.0
        %661 = vmatpush.msra.mxu0 0.0
        %662 = vmatpush.msra.mxu0 0.0
        %663 = vmatpush.msra.mxu0 0.0
        %664 = vmatpush.msra.mxu0 0.0
        %665 = vmatpush.msra.mxu0 0.0
        %666 = vmatpush.msra.mxu0 0.0
        %667 = vmatpush.msra.mxu0 0.0
        %668 = vmatpush.msra.mxu0 0.0
        %669 = vmatpush.msra.mxu0 0.0
        %670 = vmatpush.msra.mxu0 0.0
        %671 = vmatpush.msra.mxu0 0.0
        %672 = vmatpush.msra.mxu0 0.0
        %673 = vmatpush.msra.mxu0 %v654
        %674 = vmatmul.f32.gmra.mxu0 %v656
        %v675 = vpop.f32.mrf.mxu0
        %v676 = vadd.f32 0.0, %v675
        %677 = vdwg.mxu0
        %v679 = vsel %vm515, %v582, 0
        %681 = vmatpush.msra.mxu0 0.0
        %682 = vmatpush.msra.mxu0 0.0
        %683 = vmatpush.msra.mxu0 0.0
        %684 = vmatpush.msra.mxu0 0.0
        %685 = vmatpush.msra.mxu0 0.0
        %686 = vmatpush.msra.mxu0 0.0
        %687 = vmatpush.msra.mxu0 0.0
        %688 = vmatpush.msra.mxu0 0.0
        %689 = vmatpush.msra.mxu0 0.0
        %690 = vmatpush.msra.mxu0 0.0
        %691 = vmatpush.msra.mxu0 0.0
        %692 = vmatpush.msra.mxu0 0.0
        %693 = vmatpush.msra.mxu0 0.0
        %694 = vmatpush.msra.mxu0 0.0
        %695 = vmatpush.msra.mxu0 0.0
        %696 = vmatpush.msra.mxu0 %v584
        %697 = vmatmul.f32.gmra.mxu0 %v679
        %v698 = vpop.f32.mrf.mxu0
        %v699 = vadd.f32 %v676, %v698
        %700 = vdwg.mxu0
        %701 = vrot.lane.b32.xlu0 %v514, 112
        %v702 = vpop.permute.xlu0 %701
        %703 = vrot.lane.b32.xlu0 %v512, 112
        %v704 = vpop.permute.xlu0 %703
        %v705 = vsel %vm515, %v702, 0
        %v707 = vsel %vm515, %v704, 0
        %709 = vmatpush.xpose.msra.mxu0 0.0
        %710 = vmatpush.xpose.msra.mxu0 0.0
        %711 = vmatpush.xpose.msra.mxu0 0.0
        %712 = vmatpush.xpose.msra.mxu0 0.0
        %713 = vmatpush.xpose.msra.mxu0 0.0
        %714 = vmatpush.xpose.msra.mxu0 0.0
        %715 = vmatpush.xpose.msra.mxu0 0.0
        %716 = vmatpush.xpose.msra.mxu0 0.0
        %717 = vmatpush.xpose.msra.mxu0 0.0
        %718 = vmatpush.xpose.msra.mxu0 0.0
        %719 = vmatpush.xpose.msra.mxu0 0.0
        %720 = vmatpush.xpose.msra.mxu0 0.0
        %721 = vmatpush.xpose.msra.mxu0 0.0
        %722 = vmatpush.xpose.msra.mxu0 0.0
        %723 = vmatpush.xpose.msra.mxu0 0.0
        %724 = vmatpush.xpose.msra.mxu0 %v707
        %725 = vmatmul.f32.gmra.mxu0 %v705
        %v726 = vpop.f32.mrf.mxu0
        %v727 = vadd.f32 0.0, %v726
        %728 = vdwg.mxu0
        %v729 = vsel %vm515, %v727, -inf
        %730 = vmax.xlane.f32.xlu0 %v729
        %v731 = vpop.xlane.xlu0 %730
        %v732 = vsub.f32 %v727, %v731
        %v733 = vmul.f32 %v732, 1.442695
        %v734 = vpow.pop %v733
        %v735 = vsel %vm515, %v734, 0.0
        %736 = vadd.xlane.f32.xlu0 %v735
        %v737 = vpop.xlane.xlu0 %736
        %v738 = vrcp.pop %v737
        %v739 = vmul.f32 %v737, %v738
        %v740 = vsub.f32 2.0, %v739
        %v741 = vmul.f32 %v738, %v740
        %v742 = vmul.f32 %v734, %v741
        %743 = vst.msk [vmem:[%s448 + $0x2] sm:$0x1] %vm556, %v742
        %744 = vrot.lane.b32.xlu0 %v512, 80
        %v745 = vpop.permute.xlu0 %744
        %v748 = vsel %vm515, %v742, 0
        %750 = vmatpush.msra.mxu0 0.0
        %751 = vmatpush.msra.mxu0 0.0
        %752 = vmatpush.msra.mxu0 0.0
        %753 = vmatpush.msra.mxu0 0.0
        %754 = vmatpush.msra.mxu0 0.0
        %755 = vmatpush.msra.mxu0 0.0
        %756 = vmatpush.msra.mxu0 0.0
        %757 = vmatpush.msra.mxu0 0.0
        %758 = vmatpush.msra.mxu0 0.0
        %759 = vmatpush.msra.mxu0 0.0
        %760 = vmatpush.msra.mxu0 0.0
        %761 = vmatpush.msra.mxu0 0.0
        %762 = vmatpush.msra.mxu0 0.0
        %763 = vmatpush.msra.mxu0 0.0
        %764 = vmatpush.msra.mxu0 0.0
        %765 = vmatpush.msra.mxu0 %v745
        %766 = vmatmul.f32.gmra.mxu0 %v748
        %v767 = vpop.f32.mrf.mxu0
        %v768 = vadd.f32 0.0, %v767
        %769 = vdwg.mxu0
        %v770 = vld [vmem:[#allocation10 + $0x10] sm:$0xff]
        %v772 = vsel %vm515, %v768, 0
        %774 = vmatpush.msra.mxu0 0.0
        %775 = vmatpush.msra.mxu0 0.0
        %776 = vmatpush.msra.mxu0 0.0
        %777 = vmatpush.msra.mxu0 0.0
        %778 = vmatpush.msra.mxu0 0.0
        %779 = vmatpush.msra.mxu0 0.0
        %780 = vmatpush.msra.mxu0 0.0
        %781 = vmatpush.msra.mxu0 0.0
        %782 = vmatpush.msra.mxu0 0.0
        %783 = vmatpush.msra.mxu0 0.0
        %784 = vmatpush.msra.mxu0 0.0
        %785 = vmatpush.msra.mxu0 0.0
        %786 = vmatpush.msra.mxu0 0.0
        %787 = vmatpush.msra.mxu0 0.0
        %788 = vmatpush.msra.mxu0 0.0
        %789 = vmatpush.msra.mxu0 %v770
        %790 = vmatmul.f32.gmra.mxu0 %v772
        %v791 = vpop.f32.mrf.mxu0
        %v792 = vadd.f32 0.0, %v791
        %793 = vdwg.mxu0
        %v794 = vadd.f32 %v699, %v792
        %795 = vrot.lane.b32.xlu0 %v514, 104
        %v796 = vpop.permute.xlu0 %795
        %797 = vrot.lane.b32.xlu0 %v512, 104
        %v798 = vpop.permute.xlu0 %797
        %v799 = vsel %vm515, %v796, 0
        %v801 = vsel %vm515, %v798, 0
        %803 = vmatpush.xpose.msra.mxu0 0.0
        %804 = vmatpush.xpose.msra.mxu0 0.0
        %805 = vmatpush.xpose.msra.mxu0 0.0
        %806 = vmatpush.xpose.msra.mxu0 0.0
        %807 = vmatpush.xpose.msra.mxu0 0.0
        %808 = vmatpush.xpose.msra.mxu0 0.0
        %809 = vmatpush.xpose.msra.mxu0 0.0
        %810 = vmatpush.xpose.msra.mxu0 0.0
        %811 = vmatpush.xpose.msra.mxu0 0.0
        %812 = vmatpush.xpose.msra.mxu0 0.0
        %813 = vmatpush.xpose.msra.mxu0 0.0
        %814 = vmatpush.xpose.msra.mxu0 0.0
        %815 = vmatpush.xpose.msra.mxu0 0.0
        %816 = vmatpush.xpose.msra.mxu0 0.0
        %817 = vmatpush.xpose.msra.mxu0 0.0
        %818 = vmatpush.xpose.msra.mxu0 %v801
        %819 = vmatmul.f32.gmra.mxu0 %v799
        %v820 = vpop.f32.mrf.mxu0
        %v821 = vadd.f32 0.0, %v820
        %822 = vdwg.mxu0
        %v823 = vsel %vm515, %v821, -inf
        %824 = vmax.xlane.f32.xlu0 %v823
        %v825 = vpop.xlane.xlu0 %824
        %v826 = vsub.f32 %v821, %v825
        %v827 = vmul.f32 %v826, 1.442695
        %v828 = vpow.pop %v827
        %v829 = vsel %vm515, %v828, 0.0
        %830 = vadd.xlane.f32.xlu0 %v829
        %v831 = vpop.xlane.xlu0 %830
        %v832 = vrcp.pop %v831
        %v833 = vmul.f32 %v831, %v832
        %v834 = vsub.f32 2.0, %v833
        %v835 = vmul.f32 %v832, %v834
        %v836 = vmul.f32 %v828, %v835
        %837 = vst.msk [vmem:[%s448 + $0x3] sm:$0x1] %vm556, %v836
        %838 = vrot.lane.b32.xlu0 %v512, 72
        %v839 = vpop.permute.xlu0 %838
        %v842 = vsel %vm515, %v836, 0
        %844 = vmatpush.msra.mxu0 0.0
        %845 = vmatpush.msra.mxu0 0.0
        %846 = vmatpush.msra.mxu0 0.0
        %847 = vmatpush.msra.mxu0 0.0
        %848 = vmatpush.msra.mxu0 0.0
        %849 = vmatpush.msra.mxu0 0.0
        %850 = vmatpush.msra.mxu0 0.0
        %851 = vmatpush.msra.mxu0 0.0
        %852 = vmatpush.msra.mxu0 0.0
        %853 = vmatpush.msra.mxu0 0.0
        %854 = vmatpush.msra.mxu0 0.0
        %855 = vmatpush.msra.mxu0 0.0
        %856 = vmatpush.msra.mxu0 0.0
        %857 = vmatpush.msra.mxu0 0.0
        %858 = vmatpush.msra.mxu0 0.0
        %859 = vmatpush.msra.mxu0 %v839
        %860 = vmatmul.f32.gmra.mxu0 %v842
        %v861 = vpop.f32.mrf.mxu0
        %v862 = vadd.f32 0.0, %v861
        %863 = vdwg.mxu0
        %v864 = vld [vmem:[#allocation10 + $0x18] sm:$0xff]
        %v866 = vsel %vm515, %v862, 0
        %868 = vmatpush.msra.mxu0 0.0
        %869 = vmatpush.msra.mxu0 0.0
        %870 = vmatpush.msra.mxu0 0.0
        %871 = vmatpush.msra.mxu0 0.0
        %872 = vmatpush.msra.mxu0 0.0
        %873 = vmatpush.msra.mxu0 0.0
        %874 = vmatpush.msra.mxu0 0.0
        %875 = vmatpush.msra.mxu0 0.0
        %876 = vmatpush.msra.mxu0 0.0
        %877 = vmatpush.msra.mxu0 0.0
        %878 = vmatpush.msra.mxu0 0.0
        %879 = vmatpush.msra.mxu0 0.0
        %880 = vmatpush.msra.mxu0 0.0
        %881 = vmatpush.msra.mxu0 0.0
        %882 = vmatpush.msra.mxu0 0.0
        %883 = vmatpush.msra.mxu0 %v864
        %884 = vmatmul.f32.gmra.mxu0 %v866
        %v885 = vpop.f32.mrf.mxu0
        %v886 = vadd.f32 0.0, %v885
        %887 = vdwg.mxu0
        %v888 = vadd.f32 %v794, %v886
        %v889 = vld [vmem:[%s7] sm:$0x1]
        %v891 = vperm.slane %v889, 0
        %v893 = vadd.f32 %v888, %v891
        %894 = vst.msk [vmem:[%s441] sm:$0xff] %vm459, %v893
        %s895 = sand.u32 %s220, 1
        %s896 = scalar_lea.sflag [#allocation4], %s895
        %s897 = sand.u32 %s220, 1
        %s898 = smul.addr %s897, 8
        %s899 = scalar_lea.vmem [#allocation11], %s898
        %s900 = sand.u32 %s246, 1
        %s901 = scalar_lea.sflag [#allocation13], %s900
        %s902 = sand.u32 %s246, 1
        %s903 = smul.addr %s902, 4
        %s904 = scalar_lea.vmem [#allocation12], %s903
        // Predicated region
        $region73: #{tpu_custom_call.1} parent=51 // pred_check
          %p905 = pneg %p230
        $region74: #{tpu_custom_call.1} parent=51 // pred_check_branch
          %907 = sbr.rel (%p905) target = $region76
        $region75: #{tpu_custom_call.1} parent=51 // pred_region
          %909 = vsyncadd %s896, 0
          %s910 = smul.addr %s34, 8
          %s911 = scalar_lea.hbm %s8, %s910
          %s913 = sshll.u32 %s899, 4
          %s914 = int_to_ptr.vmem [resolvable:$true] %s913
          %s915 = sshll.u32 %s911, 4
          %s916 = int_to_ptr.hbm [resolvable:$true] %s915
          %918 = dma.vmem_to_hbm [thread:$0]  %s914, 128, %s916, %s896
        $region76: #{tpu_custom_call.1} parent=51 // pred_fallthru
          _
        // Predicated region
        $region77: #{tpu_custom_call.1} parent=51 // pred_check
          %p919 = pneg %p256
        $region78: #{tpu_custom_call.1} parent=51 // pred_check_branch
          %921 = sbr.rel (%p919) target = $region80
        $region79: #{tpu_custom_call.1} parent=51 // pred_region
          %923 = vsyncadd %s901, 0
          %s924 = smul.addr %s34, 4
          %s925 = scalar_lea.hbm %s9, %s924
          %s927 = sshll.u32 %s904, 4
          %s928 = int_to_ptr.vmem [resolvable:$true] %s927
          %s929 = sshll.u32 %s925, 4
          %s930 = int_to_ptr.hbm [resolvable:$true] %s929
          %932 = dma.vmem_to_hbm [thread:$0]  %s928, 64, %s930, %s901
        $region80: #{tpu_custom_call.1} parent=51 // pred_fallthru
          _
      $region52: #{tpu_custom_call.1} parent=5 // pred_fallthru
        _
      %p933 = scmp.le.s32.totalorder 2, %s29
      // Predicated region
      $region81: #{tpu_custom_call.1} parent=5 // pred_check
        %p934 = pneg %p933
      $region82: #{tpu_custom_call.1} parent=5 // pred_check_branch
        %936 = sbr.rel (%p934) target = $region84
      $region83: #{tpu_custom_call.1} parent=5 // pred_region
        %s937 = ssub.s32 %s29, 2
        // Predicated region
        $region85: #{tpu_custom_call.1} parent=83 // pred_check
          %p938 = pneg %p236
        $region86: #{tpu_custom_call.1} parent=83 // pred_check_branch
          %940 = sbr.rel (%p938) target = $region88
        $region87: #{tpu_custom_call.1} parent=83 // pred_region
          %s941 = sand.u32 %s221, 1
          %s942 = scalar_lea.sflag [#allocation4], %s941
          %s943 = sand.u32 %s221, 1
          %s944 = smul.addr %s943, 8
          %s945 = scalar_lea.vmem [#allocation11], %s944
          %947 = dma.done %s942, 128
        $region88: #{tpu_custom_call.1} parent=83 // pred_fallthru
          _
        // Predicated region
        $region89: #{tpu_custom_call.1} parent=83 // pred_check
          %p948 = pneg %p262
        $region90: #{tpu_custom_call.1} parent=83 // pred_check_branch
          %950 = sbr.rel (%p948) target = $region92
        $region91: #{tpu_custom_call.1} parent=83 // pred_region
          %s951 = sand.u32 %s247, 1
          %s952 = scalar_lea.sflag [#allocation13], %s951
          %s953 = sand.u32 %s247, 1
          %s954 = smul.addr %s953, 4
          %s955 = scalar_lea.vmem [#allocation12], %s954
          %957 = dma.done %s952, 64
        $region92: #{tpu_custom_call.1} parent=83 // pred_fallthru
          _
      $region84: #{tpu_custom_call.1} parent=5 // pred_fallthru
        _
    $region6: #{tpu_custom_call.1} parent=1 // loop_footer
      %s33 = sadd.s32 1, %s29
    $region7: #{tpu_custom_call.1} parent=1 // loop_footer_branch
      %28 = sbr.rel target = $region3
    $region8: #{tpu_custom_call.1} parent=1 // loop_exit
      _
    %958 = vsyncpa [#allocation3], 1
    %s959 = scalar_lea.sflag [#allocation3], 1
    %960 = vsyncpa %s959, 1
    %961 = vsyncpa [#allocation6], 1
    %s962 = scalar_lea.sflag [#allocation6], 1
    %963 = vsyncpa %s962, 1
    %964 = vsyncpa [#allocation9], 1
    %965 = vsyncpa [#allocation4], 1
    %s966 = scalar_lea.sflag [#allocation4], 1
    %967 = vsyncpa %s966, 1
    %968 = vsyncpa [#allocation13], 1
    %s969 = scalar_lea.sflag [#allocation13], 1
    %970 = vsyncpa %s969, 1

</llo_original>
